<compile_context>
chip_gen: v5e
topology: v5e:2x2
jax: 0.10.0
libtpu: 0.0.40
codegen_flags: <defaults>
</compile_context>

<pallas_src>
import functools

import jax
import jax.numpy as jnp
from jax.experimental import pallas as pl
from jax.experimental.pallas import tpu as pltpu

_EPS = 1e-5
_SLOPE = 0.2


# ---------------------------------------------------------------------------
# Kernels
# ---------------------------------------------------------------------------

def _fused_kernel(x_ref, noise_ref, p_ref, o_ref, *, inv_hw, hw_chunk, nchunks):
    """Whole-HW-per-block kernel, two chunked passes over the lane dim.

    x_ref:     (TC, HW)  feature-map tile (input dtype)
    noise_ref: (1, HW)   per-pixel noise (constant over channels)
    p_ref:     (TC, 3)   [style_scale+1, style_bias, noise_weight]  (f32)
    o_ref:     (TC, HW)  output tile
    """
    ys1 = p_ref[:, 0:1]
    yb = p_ref[:, 1:2]
    nw = p_ref[:, 2:3]

    def activated(off):
        xv = x_ref[:, pl.ds(off, hw_chunk)].astype(jnp.float32)
        nv = noise_ref[:, pl.ds(off, hw_chunk)].astype(jnp.float32)
        y = xv + nw * nv                       # NoiseLayer
        return jnp.maximum(y, _SLOPE * y)      # LeakyReLU(0.2)

    tc = x_ref.shape[0]
    zeros = jnp.zeros((tc, 1), jnp.float32)

    # Pass 1: single-sweep stats; the activated chunk dies right after the
    # reduction, so no full-tile f32 temp has to be spilled to VMEM.
    if nchunks == 1:
        y = activated(0)
        s1 = jnp.sum(y, axis=-1, keepdims=True)
        s2 = jnp.sum(y * y, axis=-1, keepdims=True)
    else:
        def p1(i, carry):
            s1, s2 = carry
            off = pl.multiple_of(i * hw_chunk, hw_chunk)
            y = activated(off)
            return (s1 + jnp.sum(y, axis=-1, keepdims=True),
                    s2 + jnp.sum(y * y, axis=-1, keepdims=True))
        s1, s2 = jax.lax.fori_loop(0, nchunks, p1, (zeros, zeros))

    # InstanceNorm (biased var) + StyleMod folded into per-channel scale/offset.
    mean = s1 * inv_hw
    var = jnp.maximum(s2 * inv_hw - mean * mean, 0.0)   # guard cancellation
    scale = jax.lax.rsqrt(var + _EPS) * ys1
    offset = yb - mean * scale

    # Pass 2: recompute (cheap) + normalize + style; lane-aligned stores.
    if nchunks == 1:
        o_ref[...] = (activated(0) * scale + offset).astype(o_ref.dtype)
    else:
        @pl.loop(0, nchunks)
        def _(i):
            off = pl.multiple_of(i * hw_chunk, hw_chunk)
            o_ref[:, pl.ds(off, hw_chunk)] = (
                activated(off) * scale + offset).astype(o_ref.dtype)


def _stats_kernel(x_ref, noise_ref, p_ref, so_ref, s1_ref, s2_ref, *, inv_hw):
    """HW-tiled stats pass (large resolutions).

    Accumulates s1/s2 over the innermost ("arbitrary") HW grid axis and emits
    per-channel [scale, offset] at the last HW step.
    """
    hw = pl.program_id(2)

    @pl.when(hw == 0)
    def _():
        s1_ref[...] = jnp.zeros_like(s1_ref)
        s2_ref[...] = jnp.zeros_like(s2_ref)

    nw = p_ref[:, 2:3]
    y = x_ref[...].astype(jnp.float32) + nw * noise_ref[...].astype(jnp.float32)
    y = jnp.maximum(y, _SLOPE * y)
    s1_ref[...] += jnp.sum(y, axis=-1, keepdims=True)
    s2_ref[...] += jnp.sum(y * y, axis=-1, keepdims=True)

    @pl.when(hw == pl.num_programs(2) - 1)
    def _():
        mean = s1_ref[...] * inv_hw
        var = jnp.maximum(s2_ref[...] * inv_hw - mean * mean, 0.0)
        scale = jax.lax.rsqrt(var + _EPS) * p_ref[:, 0:1]
        so_ref[:, 0:1] = scale
        so_ref[:, 1:2] = p_ref[:, 1:2] - mean * scale


def _apply_kernel(x_ref, noise_ref, p_ref, o_ref):
    """HW-tiled apply pass: p_ref = (TC, 3) [scale, offset, noise_weight]."""
    scale = p_ref[:, 0:1]
    offset = p_ref[:, 1:2]
    nw = p_ref[:, 2:3]
    y = x_ref[...].astype(jnp.float32) + nw * noise_ref[...].astype(jnp.float32)
    y = jnp.maximum(y, _SLOPE * y)
    o_ref[...] = (y * scale + offset).astype(o_ref.dtype)


# ---------------------------------------------------------------------------
# Tiling / budget helpers (all pure-Python, trace-time)
# ---------------------------------------------------------------------------

def _vmem_budgets():
    """(vmem_limit_bytes, per-x-tile budget) derived from the device."""
    cap = 64 << 20                              # conservative default (v7x)
    try:
        info = pltpu.get_tpu_info()
        cap = int(getattr(info, "vmem_capacity_bytes", cap)) or cap
    except Exception:
        pass
    cap = max(32 << 20, min(cap, 128 << 20))
    vmem_limit = max(32 << 20, min(cap - (8 << 20), int(cap * 0.875)))
    # True per-step VMEM ~ 2*T(in) + 2*T(out) + chunk temps + noise  =>  ~/6.
    tile_budget = min(16 << 20, max(1 << 20, vmem_limit // 6))
    return vmem_limit, tile_budget


def _legal_channel_tiles(C, sub):
    tiles = [d for d in range(sub, C, sub) if C % d == 0]
    tiles.append(C)
    return sorted(set(tiles))


def _pick_channel_tile(C, HW, itemsize, sub, tile_budget, n_batch):
    """Largest legal channel tile whose (tc, HW) block fits the budget.
    Returns None if nothing fits (caller switches to the HW-tiled path)."""
    legal = _legal_channel_tiles(C, sub)
    fits = [t for t in legal if t * HW * itemsize <= tile_budget]
    if not fits:
        return None
    tc = max(fits)
    # Megacore (v7x): make sure there are >= 2 grid cells when possible.
    if n_batch * (C // tc) < 2:
        halves = [t for t in fits if C // t >= 2]
        if halves:
            tc = max(halves)
    return tc


def _pick_hw_chunk(HW, tc):
    """Lane chunk for the in-kernel two-pass loop: multiple of 128 dividing
    HW, sized so the f32 chunk working set stays small (~<= 1.5 MiB)."""
    if HW % 128 != 0:
        return HW
    target = max(128, min(HW, (128 * 1024) // max(tc, 1)))
    best, d = 128, 128
    while d <= target:
        if HW % d == 0:
            best = d
        d += 128
    return best


def _pick_split_tiles(C, HW, itemsize, sub, tile_budget):
    """(tc, thw) block for the HW-tiled two-kernel path (lane-dense thw)."""
    legal = _legal_channel_tiles(C, sub)
    tc_min = legal[0]
    cap = max(128, min(HW, tile_budget // max(tc_min * itemsize, 1), 1 << 17))
    thw, d = 128, 128
    while d <= cap:
        if HW % d == 0:
            thw = d
        d += 128
    fits = [t for t in legal if t * thw * itemsize <= tile_budget]
    tc = max(fits) if fits else tc_min
    return tc, thw


# ---------------------------------------------------------------------------
# XLA fallback for lane-starved tiny layers (4x4 / 8x8)
# ---------------------------------------------------------------------------

def _xla_epilogue(x, noise, noise_weight, ys1, yb):
    C = x.shape[1]
    y = (x.astype(jnp.float32)
         + noise_weight.astype(jnp.float32).reshape(1, C, 1, 1)
         * noise.astype(jnp.float32))
    y = jnp.maximum(y, _SLOPE * y)
    mean = jnp.mean(y, axis=(2, 3), keepdims=True)
    var = jnp.mean(jnp.square(y - mean), axis=(2, 3), keepdims=True)
    y = (y - mean) * jax.lax.rsqrt(var + _EPS)
    out = y * ys1[:, :, None, None] + yb[:, :, None, None]
    return out.astype(x.dtype)


# ---------------------------------------------------------------------------
# Public wrapper
# ---------------------------------------------------------------------------

def layer_epilogue(x_nchw, noise_n1hw, noise_weight, dlatents, style_w, style_b,
                   *, tile_budget_bytes=None, vmem_limit_bytes=None,
                   donate_x=True):
    """StyleGAN LayerEpilogue forward.

    x_nchw: (N,C,H,W); noise_n1hw: (N,1,H,W); noise_weight: (C,);
    dlatents: (N,D); style_w: (D,2C) pre-scaled by w_mul; style_b: (2C,)
    pre-scaled by b_mul.

    donate_x=True lets the Pallas output alias x's buffer (in-place under
    jit); callers must not reuse x_nchw afterwards.
    """
    N, C, H, W = x_nchw.shape
    HW = H * W

    # Hoisted style GEMM: one (N,D)x(D,2C) MXU matmul via XLA instead of N
    # degenerate GEMVs inside the kernel.
    style = (dlatents.astype(jnp.float32) @ style_w.astype(jnp.float32)
             + style_b.astype(jnp.float32)[None, :])                 # (N, 2C)
    ys1 = style[:, :C] + 1.0
    yb = style[:, C:]

    # Tiny layers: last dim < 128 lanes => masked partial stores + per-step
    # Pallas overhead dominate; plain XLA wins here.
    if HW < 128:
        return _xla_epilogue(x_nchw, noise_n1hw, noise_weight, ys1, yb)

    auto_limit, auto_budget = _vmem_budgets()
    vmem_limit = int(vmem_limit_bytes or auto_limit)
    tile_budget = int(tile_budget_bytes or auto_budget)

    itemsize = jnp.dtype(x_nchw.dtype).itemsize
    sub = {4: 8, 2: 16, 1: 32}.get(itemsize, 8)    # sublane packing granule

    x = x_nchw.reshape(N, C, HW)
    noise = noise_n1hw.reshape(N, 1, HW)
    nwb = jnp.broadcast_to(noise_weight.astype(jnp.float32).reshape(1, C), (N, C))
    params = jnp.stack([ys1, yb, nwb], axis=-1)    # (N, C, 3): 1 tiny DMA/step

    alias = {0: 0} if donate_x else {}

    tc = _pick_channel_tile(C, HW, itemsize, sub, tile_budget, N)
    if tc is not None:
        # ---- fused path: one kernel, whole HW per block --------------------
        hw_chunk = _pick_hw_chunk(HW, tc)
        nchunks = HW // hw_chunk
        kernel = functools.partial(_fused_kernel, inv_hw=1.0 / HW,
                                   hw_chunk=hw_chunk, nchunks=nchunks)
        out = pl.pallas_call(
            kernel,
            out_shape=jax.ShapeDtypeStruct((N, C, HW), x_nchw.dtype),
            grid_spec=pltpu.PrefetchScalarGridSpec(
                num_scalar_prefetch=0,
                grid=(N, C // tc),
                in_specs=[
                    pl.BlockSpec((None, tc, HW), lambda n, c: (n, c, 0)),
                    pl.BlockSpec((None, 1, HW), lambda n, c: (n, 0, 0)),
                    pl.BlockSpec((None, tc, 3), lambda n, c: (n, c, 0)),
                ],
                out_specs=pl.BlockSpec((None, tc, HW), lambda n, c: (n, c, 0)),
            ),
            compiler_params=pltpu.CompilerParams(
                dimension_semantics=("parallel", "parallel"),
                vmem_limit_bytes=vmem_limit),
            input_output_aliases=alias,
        )(x, noise, params)
        return out.reshape(N, C, H, W)

    if HW % 128 != 0:
        # TODO(synk): non-128-multiple spatial sizes too large for one block
        # would need Element-indexed HW tiling; StyleGAN uses powers of two.
        return _xla_epilogue(x_nchw, noise_n1hw, noise_weight, ys1, yb)

    # ---- split path: HW-tiled stats kernel + lane-dense apply kernel -------
    tc, thw = _pick_split_tiles(C, HW, itemsize, sub, tile_budget)
    grid = (N, C // tc, HW // thw)
    data_in_specs = [
        pl.BlockSpec((None, tc, thw), lambda n, c, h: (n, c, h)),
        pl.BlockSpec((None, 1, thw), lambda n, c, h: (n, 0, h)),
        pl.BlockSpec((None, tc, 3), lambda n, c, h: (n, c, 0)),
    ]

    so = pl.pallas_call(
        functools.partial(_stats_kernel, inv_hw=1.0 / HW),
        out_shape=jax.ShapeDtypeStruct((N, C, 2), jnp.float32),
        grid_spec=pltpu.PrefetchScalarGridSpec(
            num_scalar_prefetch=0,
            grid=grid,
            in_specs=data_in_specs,
            out_specs=pl.BlockSpec((None, tc, 2), lambda n, c, h: (n, c, 0)),
            scratch_shapes=[pltpu.VMEM((tc, 1), jnp.float32),
                            pltpu.VMEM((tc, 1), jnp.float32)],
        ),
        compiler_params=pltpu.CompilerParams(
            dimension_semantics=("parallel", "parallel", "arbitrary"),
            vmem_limit_bytes=vmem_limit),
    )(x, noise, params)

    params_a = jnp.concatenate([so, params[:, :, 2:3]], axis=-1)    # (N, C, 3)

    out = pl.pallas_call(
        _apply_kernel,
        out_shape=jax.ShapeDtypeStruct((N, C, HW), x_nchw.dtype),
        grid_spec=pltpu.PrefetchScalarGridSpec(
            num_scalar_prefetch=0,
            grid=grid,
            in_specs=data_in_specs,
            out_specs=pl.BlockSpec((None, tc, thw), lambda n, c, h: (n, c, h)),
        ),
        compiler_params=pltpu.CompilerParams(
            dimension_semantics=("parallel", "parallel", "parallel"),
            vmem_limit_bytes=vmem_limit),
        input_output_aliases=alias,
    )(x, noise, params_a)
    return out.reshape(N, C, H, W)


# ---------------------------------------------------------------------------
# Pure-JAX reference + self-test
# ---------------------------------------------------------------------------

def _reference(x, noise, noise_weight, dlatents, style_w, style_b):
    N, C, H, W = x.shape
    y = x + noise_weight.reshape(1, C, 1, 1) * noise
    y = jnp.where(y >= 0, y, _SLOPE * y)
    mean = jnp.mean(y, axis=(2, 3), keepdims=True)
    var = jnp.mean((y - mean) ** 2, axis=(2, 3), keepdims=True)
    y = (y - mean) / jnp.sqrt(var + _EPS)
    style = dlatents @ style_w + style_b
    ys = style[:, :C].reshape(N, C, 1, 1)
    yb = style[:, C:].reshape(N, C, 1, 1)
    return y * (ys + 1.0) + yb


if __name__ == "__main__":
    key = jax.random.PRNGKey(0)

    def make_inputs(k, N, C, H, W, D):
        k_x, k_noise, k_lat, k_w = jax.random.split(k, 4)
        x = jax.random.normal(k_x, (N, C, H, W), jnp.float32)
        noise = jax.random.normal(k_noise, (N, 1, H, W), jnp.float32)
        dlat = jax.random.normal(k_lat, (N, D), jnp.float32)
        # NoiseLayer.weight is zero-init in torch; use nonzero values so the
        # noise path is actually exercised.
        noise_weight = 0.1 * jnp.arange(C, dtype=jnp.float32)
        # MyLinear(D, 2C, gain=1.0, use_wscale=True): init_std=1, w_mul=D**-0.5
        w_raw = jax.random.normal(k_w, (2 * C, D), jnp.float32)     # (out, in)
        style_w = (w_raw * (D ** -0.5)).T                           # (D, 2C)
        style_b = jnp.zeros((2 * C,), jnp.float32)                  # zeros, b_mul=1
        return x, noise, noise_weight, dlat, style_w, style_b

    def check(args, **kw):
        ref = _reference(*args)
        out = jax.block_until_ready(layer_epilogue(*args, **kw))
        assert out.shape == ref.shape
        assert jnp.allclose(out, ref, atol=1e-4, rtol=1e-4), "mismatch vs reference"

    k1, k2, k3 = jax.random.split(key, 3)
    # 1) primary small config -> fused single-kernel path.
    check(make_inputs(k1, 2, 4, 16, 16, 32))
    # 2) force the HW-tiled stats+apply path with a tiny tile budget.
    check(make_inputs(k2, 1, 8, 32, 32, 16), tile_budget_bytes=16 * 1024)
    # 3) tiny 4x4 layer -> lane-starved, dispatched to the XLA fallback.
    check(make_inputs(k3, 2, 8, 4, 4, 16))

    print("KERNEL_OK")
</pallas_src>

<mosaic_0001>
module attributes {stable_mosaic.version = 11 : i64} {
  func.func @_fused_kernel(%arg0: i32, %arg1: i32, %arg2: memref<1x4x256xf32, #tpu.memory_space<vmem>>, %arg3: memref<1x1x256xf32, #tpu.memory_space<vmem>>, %arg4: memref<1x4x3xf32, #tpu.memory_space<vmem>>, %arg5: memref<1x4x256xf32, #tpu.memory_space<vmem>>) attributes {dimension_semantics = [#tpu.dimension_semantics<parallel>, #tpu.dimension_semantics<parallel>], iteration_bounds = array<i64: 2, 1>, scalar_prefetch = 0 : i64, scratch_operands = 0 : i64, tpu.core_type = #tpu.core_type<tc>, window_params = [{transform_indices = @transform_0, window_bounds = array<i64: 1, 4, 256>}, {transform_indices = @transform_1, window_bounds = array<i64: 1, 1, 256>}, {transform_indices = @transform_2, window_bounds = array<i64: 1, 4, 3>}, {transform_indices = @transform_3, window_bounds = array<i64: 1, 4, 256>}]} {
    %c0 = arith.constant 0 : index
    %c0_0 = arith.constant 0 : index
    %c0_1 = arith.constant 0 : index
    %0 = vector.load %arg4[%c0, %c0_0, %c0_1] : memref<1x4x3xf32, #tpu.memory_space<vmem>>, vector<1x4x1xf32>
    %1 = vector.shape_cast %0 : vector<1x4x1xf32> to vector<4x1xf32>
    %c0_2 = arith.constant 0 : index
    %c0_3 = arith.constant 0 : index
    %c1 = arith.constant 1 : index
    %2 = vector.load %arg4[%c0_2, %c0_3, %c1] : memref<1x4x3xf32, #tpu.memory_space<vmem>>, vector<1x4x1xf32>
    %3 = vector.shape_cast %2 : vector<1x4x1xf32> to vector<4x1xf32>
    %c0_4 = arith.constant 0 : index
    %c0_5 = arith.constant 0 : index
    %c2 = arith.constant 2 : index
    %4 = vector.load %arg4[%c0_4, %c0_5, %c2] : memref<1x4x3xf32, #tpu.memory_space<vmem>>, vector<1x4x1xf32>
    %5 = vector.shape_cast %4 : vector<1x4x1xf32> to vector<4x1xf32>
    %c0_6 = arith.constant 0 : index
    %c0_7 = arith.constant 0 : index
    %c0_8 = arith.constant 0 : index
    %6 = vector.load %arg2[%c0_6, %c0_7, %c0_8] : memref<1x4x256xf32, #tpu.memory_space<vmem>>, vector<1x4x256xf32>
    %7 = vector.shape_cast %6 : vector<1x4x256xf32> to vector<4x256xf32>
    %c0_9 = arith.constant 0 : index
    %c0_10 = arith.constant 0 : index
    %c0_11 = arith.constant 0 : index
    %8 = vector.load %arg3[%c0_9, %c0_10, %c0_11] : memref<1x1x256xf32, #tpu.memory_space<vmem>>, vector<1x1x256xf32>
    %9 = vector.shape_cast %8 : vector<1x1x256xf32> to vector<1x256xf32>
    %10 = vector.broadcast %5 : vector<4x1xf32> to vector<4x256xf32>
    %11 = vector.broadcast %9 : vector<1x256xf32> to vector<4x256xf32>
    %12 = arith.mulf %10, %11 : vector<4x256xf32>
    %13 = arith.addf %7, %12 : vector<4x256xf32>
    %cst = arith.constant 2.000000e-01 : f32
    %14 = vector.broadcast %cst : f32 to vector<4x256xf32>
    %15 = arith.mulf %14, %13 : vector<4x256xf32>
    %16 = arith.maximumf %13, %15 : vector<4x256xf32>
    %cst_12 = arith.constant dense<0.000000e+00> : vector<4xf32>
    %17 = vector.multi_reduction <add>, %16, %cst_12 [1] : vector<4x256xf32> to vector<4xf32>
    %18 = vector.shape_cast %17 : vector<4xf32> to vector<4x1xf32>
    %19 = arith.mulf %16, %16 : vector<4x256xf32>
    %cst_13 = arith.constant dense<0.000000e+00> : vector<4xf32>
    %20 = vector.multi_reduction <add>, %19, %cst_13 [1] : vector<4x256xf32> to vector<4xf32>
    %21 = vector.shape_cast %20 : vector<4xf32> to vector<4x1xf32>
    %cst_14 = arith.constant 3.906250e-03 : f32
    %22 = vector.broadcast %cst_14 : f32 to vector<4x1xf32>
    %23 = arith.mulf %18, %22 : vector<4x1xf32>
    %cst_15 = arith.constant 3.906250e-03 : f32
    %24 = vector.broadcast %cst_15 : f32 to vector<4x1xf32>
    %25 = arith.mulf %21, %24 : vector<4x1xf32>
    %26 = arith.mulf %23, %23 : vector<4x1xf32>
    %27 = arith.subf %25, %26 : vector<4x1xf32>
    %cst_16 = arith.constant 0.000000e+00 : f32
    %28 = vector.broadcast %cst_16 : f32 to vector<4x1xf32>
    %29 = arith.maximumf %27, %28 : vector<4x1xf32>
    %cst_17 = arith.constant 9.99999974E-6 : f32
    %30 = vector.broadcast %cst_17 : f32 to vector<4x1xf32>
    %31 = arith.addf %29, %30 : vector<4x1xf32>
    %32 = math.rsqrt %31 : vector<4x1xf32>
    %33 = arith.mulf %32, %1 : vector<4x1xf32>
    %34 = arith.mulf %23, %33 : vector<4x1xf32>
    %35 = arith.subf %3, %34 : vector<4x1xf32>
    %c0_18 = arith.constant 0 : index
    %c0_19 = arith.constant 0 : index
    %c0_20 = arith.constant 0 : index
    %36 = vector.load %arg2[%c0_18, %c0_19, %c0_20] : memref<1x4x256xf32, #tpu.memory_space<vmem>>, vector<1x4x256xf32>
    %37 = vector.shape_cast %36 : vector<1x4x256xf32> to vector<4x256xf32>
    %c0_21 = arith.constant 0 : index
    %c0_22 = arith.constant 0 : index
    %c0_23 = arith.constant 0 : index
    %38 = vector.load %arg3[%c0_21, %c0_22, %c0_23] : memref<1x1x256xf32, #tpu.memory_space<vmem>>, vector<1x1x256xf32>
    %39 = vector.shape_cast %38 : vector<1x1x256xf32> to vector<1x256xf32>
    %40 = vector.broadcast %5 : vector<4x1xf32> to vector<4x256xf32>
    %41 = vector.broadcast %39 : vector<1x256xf32> to vector<4x256xf32>
    %42 = arith.mulf %40, %41 : vector<4x256xf32>
    %43 = arith.addf %37, %42 : vector<4x256xf32>
    %cst_24 = arith.constant 2.000000e-01 : f32
    %44 = vector.broadcast %cst_24 : f32 to vector<4x256xf32>
    %45 = arith.mulf %44, %43 : vector<4x256xf32>
    %46 = arith.maximumf %43, %45 : vector<4x256xf32>
    %47 = vector.broadcast %33 : vector<4x1xf32> to vector<4x256xf32>
    %48 = arith.mulf %46, %47 : vector<4x256xf32>
    %49 = vector.broadcast %35 : vector<4x1xf32> to vector<4x256xf32>
    %50 = arith.addf %48, %49 : vector<4x256xf32>
    %c0_25 = arith.constant 0 : index
    %c0_26 = arith.constant 0 : index
    %c0_27 = arith.constant 0 : index
    %51 = vector.load %arg5[%c0_25, %c0_26, %c0_27] : memref<1x4x256xf32, #tpu.memory_space<vmem>>, vector<1x4x256xf32>
    %52 = vector.shape_cast %51 : vector<1x4x256xf32> to vector<4x256xf32>
    %53 = vector.shape_cast %50 : vector<4x256xf32> to vector<1x4x256xf32>
    tpu.vector_store %arg5[%c0_25, %c0_26, %c0_27], %53 {strides = array<i32>} : memref<1x4x256xf32, #tpu.memory_space<vmem>>, vector<1x4x256xf32>,
    return
  }
  func.func @transform_0(%arg0: i32, %arg1: i32) -> (i32, i32, i32) {
    %c0_i32 = arith.constant 0 : i32
    %c0_i32_0 = arith.constant 0 : i32
    return %arg0, %arg1, %c0_i32 : i32, i32, i32
  }
  func.func @transform_1(%arg0: i32, %arg1: i32) -> (i32, i32, i32) {
    %c0_i32 = arith.constant 0 : i32
    %c0_i32_0 = arith.constant 0 : i32
    %c0_i32_1 = arith.constant 0 : i32
    return %arg0, %c0_i32, %c0_i32_0 : i32, i32, i32
  }
  func.func @transform_2(%arg0: i32, %arg1: i32) -> (i32, i32, i32) {
    %c0_i32 = arith.constant 0 : i32
    %c0_i32_0 = arith.constant 0 : i32
    return %arg0, %arg1, %c0_i32 : i32, i32, i32
  }
  func.func @transform_3(%arg0: i32, %arg1: i32) -> (i32, i32, i32) {
    %c0_i32 = arith.constant 0 : i32
    %c0_i32_0 = arith.constant 0 : i32
    return %arg0, %arg1, %c0_i32 : i32, i32, i32
  }
}

</mosaic_0001>

<llo_original>
// kernel: tpu_custom_call.1
$region0: #{tpu_custom_call.1}
  #allocation0 [shape = 'u32[]', space=smem, size = 0x4, offset = 0x4, fixed_abs, tag = 'smem constant byte address 0x4 - core index']
  #allocation1 [shape = 'u32[72,128]{1,0:T(1,128)}', space=vmem, size = 0x9000, scoped, tag = 'internal scratch']
  %s0 = inlined_call_operand.hbm [shape: f32[2,4,256], index: 0, kind: input, shape index: {}, may-alias: {0,3}]
  %s1 = inlined_call_operand.vmem [shape: f32[2,1,256], index: 1, kind: input, shape index: {}]
  %s2 = inlined_call_operand.vmem [shape: f32[2,4,3], index: 2, kind: input, shape index: {}]
  %s3 = inlined_call_operand.hbm [shape: f32[2,4,256], index: 3, kind: output, shape index: {}, may-alias: {0,3}]
  %s4 = sld [smem:[#allocation0]]
  $region49: #{tpu_custom_call.1} parent=0
    _
  %s6 = ssub.s32 1, %s4
  %s7 = scalar_select 0, %s6, %s4
  $region1: #{tpu_custom_call.1} parent=0
    #allocation2 [shape = 'u8[8192]{0}', space=vmem, size = 0x2000, scoped, tag = 'input window, operand 0']
    #allocation3 [shape = 's32[2]{0}', space=sflag, size = 0x8, scoped, tag = 'scoped memory for tpu_custom_call.1']
    #allocation4 [shape = 's32[2]{0}', space=sflag, size = 0x8, scoped, tag = 'scoped memory for tpu_custom_call.1']
    #allocation5 [shape = 'u8[8192]{0}', space=vmem, size = 0x2000, scoped, tag = 'output window, operand 0']
    %8 = vsyncpa [#allocation3], 0
    %s9 = scalar_lea.sflag [#allocation3], 1
    %10 = vsyncpa %s9, 0
    %11 = vsyncpa [#allocation4], 0
    %s12 = scalar_lea.sflag [#allocation4], 1
    %13 = vsyncpa %s12, 0
    loop: start=0, step=1, limit=4
    $region2: #{tpu_custom_call.1} parent=1 // loop_pre_header
      _
    $region3: #{tpu_custom_call.1} parent=1 // loop_header
      %s15 = sphi 0, %s19
      %p16 = scmp.ge.s32.totalorder %s15, 4
      %s22 = sphi 0, %s34
      %s23 = sphi 0, %s30
      %s24 = sphi 0, %s22
      %s25 = sphi 0, %s23
      %s26 = sphi 0, %s24
      %s27 = sphi 0, %s25
      %s39 = sphi 0, %s41
      %s42 = sphi 0, %s39
      %s43 = sphi 0, %s42
      %s59 = sphi 0, %s43
      %s65 = sphi 0, %s67
      %s68 = sphi 0, %s65
      %s69 = sphi 0, %s68
      %s85 = sphi 0, %s69
      %s93 = sphi 0, %s95
      %s96 = sphi 0, %s93
      %s97 = sphi 0, %s96
      %s113 = sphi 0, %s97
      %s121 = sphi 0, %s123
      %s124 = sphi 0, %s121
      %s125 = sphi 0, %s124
      %s141 = sphi 0, %s125
    $region4: #{tpu_custom_call.1} parent=1 // loop_header_branch
      %18 = sbr.rel (%p16) target = $region8
    $region5: #{tpu_custom_call.1} parent=1 // loop_body
      %s20 = ssub.s32 %s15, 1
      %s21 = ssub.s32 %s15, 2
      %s28 = sadd.s32 1, %s23
      %p29 = scmp.ge.s32.totalorder %s28, 1
      %s30 = scalar_select %p29, 0, %s28
      %s31 = sadd.s32 1, %s22
      %s32 = scalar_select %p29, %s31, %s22
      %p33 = scmp.ge.s32.totalorder %s32, 2
      %s34 = scalar_select %p33, 0, %s32
      %s35 = ssub.s32 %s22, %s34
      %s36 = ssub.s32 %s23, %s30
      %s37 = sor.u32 %s35, %s36
      %p38 = scmp.eq.s32.totalorder %s37, 0
      %s40 = sadd.s32 %s39, 1
      %s41 = scalar_select %p38, %s39, %s40
      %p44 = pneg %p38
      %p45 = scmp.eq.s32.totalorder %s15, 1
      %p46 = por %p44, %p45
      %p47 = scmp.ne.s32.totalorder %s39, %s42
      %p48 = scmp.eq.s32.totalorder %s15, 0
      %p49 = por %p47, %p48
      %p50 = scmp.ne.s32.totalorder %s39, %s42
      %p51 = scmp.eq.s32.totalorder %s20, 1
      %p52 = por %p50, %p51
      %p53 = scmp.ne.s32.totalorder %s42, %s43
      %p54 = scmp.eq.s32.totalorder %s20, 0
      %p55 = por %p53, %p54
      %p56 = scmp.ne.s32.totalorder %s42, %s43
      %p57 = scmp.eq.s32.totalorder %s21, 1
      %p58 = por %p56, %p57
      %p60 = scmp.ne.s32.totalorder %s43, %s59
      %p61 = scmp.eq.s32.totalorder %s21, 0
      %p62 = por %p60, %p61
      %s63 = ssub.s32 %s22, %s34
      %p64 = scmp.eq.s32.totalorder %s63, 0
      %s66 = sadd.s32 %s65, 1
      %s67 = scalar_select %p64, %s65, %s66
      %p70 = pneg %p64
      %p71 = scmp.eq.s32.totalorder %s15, 1
      %p72 = por %p70, %p71
      %p73 = scmp.ne.s32.totalorder %s65, %s68
      %p74 = scmp.eq.s32.totalorder %s15, 0
      %p75 = por %p73, %p74
      %p76 = scmp.ne.s32.totalorder %s65, %s68
      %p77 = scmp.eq.s32.totalorder %s20, 1
      %p78 = por %p76, %p77
      %p79 = scmp.ne.s32.totalorder %s68, %s69
      %p80 = scmp.eq.s32.totalorder %s20, 0
      %p81 = por %p79, %p80
      %p82 = scmp.ne.s32.totalorder %s68, %s69
      %p83 = scmp.eq.s32.totalorder %s21, 1
      %p84 = por %p82, %p83
      %p86 = scmp.ne.s32.totalorder %s69, %s85
      %p87 = scmp.eq.s32.totalorder %s21, 0
      %p88 = por %p86, %p87
      %s89 = ssub.s32 %s22, %s34
      %s90 = ssub.s32 %s23, %s30
      %s91 = sor.u32 %s89, %s90
      %p92 = scmp.eq.s32.totalorder %s91, 0
      %s94 = sadd.s32 %s93, 1
      %s95 = scalar_select %p92, %s93, %s94
      %p98 = pneg %p92
      %p99 = scmp.eq.s32.totalorder %s15, 1
      %p100 = por %p98, %p99
      %p101 = scmp.ne.s32.totalorder %s93, %s96
      %p102 = scmp.eq.s32.totalorder %s15, 0
      %p103 = por %p101, %p102
      %p104 = scmp.ne.s32.totalorder %s93, %s96
      %p105 = scmp.eq.s32.totalorder %s20, 1
      %p106 = por %p104, %p105
      %p107 = scmp.ne.s32.totalorder %s96, %s97
      %p108 = scmp.eq.s32.totalorder %s20, 0
      %p109 = por %p107, %p108
      %p110 = scmp.ne.s32.totalorder %s96, %s97
      %p111 = scmp.eq.s32.totalorder %s21, 1
      %p112 = por %p110, %p111
      %p114 = scmp.ne.s32.totalorder %s97, %s113
      %p115 = scmp.eq.s32.totalorder %s21, 0
      %p116 = por %p114, %p115
      %s117 = ssub.s32 %s22, %s34
      %s118 = ssub.s32 %s23, %s30
      %s119 = sor.u32 %s117, %s118
      %p120 = scmp.eq.s32.totalorder %s119, 0
      %s122 = sadd.s32 %s121, 1
      %s123 = scalar_select %p120, %s121, %s122
      %p126 = pneg %p120
      %p127 = scmp.eq.s32.totalorder %s15, 1
      %p128 = por %p126, %p127
      %p129 = scmp.ne.s32.totalorder %s121, %s124
      %p130 = scmp.eq.s32.totalorder %s15, 0
      %p131 = por %p129, %p130
      %p132 = scmp.ne.s32.totalorder %s121, %s124
      %p133 = scmp.eq.s32.totalorder %s20, 1
      %p134 = por %p132, %p133
      %p135 = scmp.ne.s32.totalorder %s124, %s125
      %p136 = scmp.eq.s32.totalorder %s20, 0
      %p137 = por %p135, %p136
      %p138 = scmp.ne.s32.totalorder %s124, %s125
      %p139 = scmp.eq.s32.totalorder %s21, 1
      %p140 = por %p138, %p139
      %p142 = scmp.ne.s32.totalorder %s125, %s141
      %p143 = scmp.eq.s32.totalorder %s21, 0
      %p144 = por %p142, %p143
      %p145 = scmp.le.s32.totalorder 1, %s15
      %p146 = scmp.lt.s32.totalorder %s15, 3
      %p147 = pnand %p145, %p146
      %p148 = pneg %p147
      // Predicated region
      $region9: #{tpu_custom_call.1} parent=5 // pred_check
        _
      $region10: #{tpu_custom_call.1} parent=5 // pred_check_branch
        %150 = sbr.rel (%p147) target = $region12
      $region11: #{tpu_custom_call.1} parent=5 // pred_region
        %s151 = ssub.s32 %s15, 1
      $region12: #{tpu_custom_call.1} parent=5 // pred_fallthru
        _
      %p152 = scmp.lt.s32.totalorder %s15, 2
      // Predicated region
      $region13: #{tpu_custom_call.1} parent=5 // pred_check
        %p153 = pneg %p152
      $region14: #{tpu_custom_call.1} parent=5 // pred_check_branch
        %155 = sbr.rel (%p153) target = $region16
      $region15: #{tpu_custom_call.1} parent=5 // pred_region
        // Predicated region
        $region17: #{tpu_custom_call.1} parent=15 // pred_check
          %p156 = pneg %p49
        $region18: #{tpu_custom_call.1} parent=15 // pred_check_branch
          %158 = sbr.rel (%p156) target = $region20
        $region19: #{tpu_custom_call.1} parent=15 // pred_region
          %s159 = sand.u32 %s39, 1
          %s160 = scalar_lea.sflag [#allocation3], %s159
          %s161 = sand.u32 %s39, 1
          %s162 = smul.addr %s161, 8
          %s163 = scalar_lea.vmem [#allocation2], %s162
          %165 = vsyncadd %s160, 0
          %s166 = smul.addr %s23, 2
          %s167 = smul.addr %s22, 2
          %s168 = sadd.s32 %s166, %s167
          %s169 = smul.addr %s168, 4
          %s170 = scalar_lea.hbm %s0, %s169
          %s172 = sshll.u32 %s170, 4
          %s173 = int_to_ptr.hbm [resolvable:$true] %s172
          %s174 = sshll.u32 %s163, 4
          %s175 = int_to_ptr.vmem [resolvable:$true] %s174
          %177 = dma.hbm_to_vmem [thread:$0]  %s173, 128, %s175, %s160
        $region20: #{tpu_custom_call.1} parent=15 // pred_fallthru
          _
        // Predicated region
        $region21: #{tpu_custom_call.1} parent=15 // pred_check
          %p178 = pneg %p75
        $region22: #{tpu_custom_call.1} parent=15 // pred_check_branch
          %180 = sbr.rel (%p178) target = $region24
        $region23: #{tpu_custom_call.1} parent=15 // pred_region
          %p181 = scmp.lt.s32.totalorder %s22, 1
          %s182 = scalar_select %p181, %s22, 1
          %s183 = smul.addr %s182, 2
          %s184 = scalar_lea.vmem %s1, %s183
        $region24: #{tpu_custom_call.1} parent=15 // pred_fallthru
          _
        // Predicated region
        $region25: #{tpu_custom_call.1} parent=15 // pred_check
          %p185 = pneg %p103
        $region26: #{tpu_custom_call.1} parent=15 // pred_check_branch
          %187 = sbr.rel (%p185) target = $region28
        $region27: #{tpu_custom_call.1} parent=15 // pred_region
          %p188 = scmp.lt.s32.totalorder %s22, 1
          %s189 = scalar_select %p188, %s22, 1
          %p190 = scmp.lt.s32.totalorder %s23, 0
          %s191 = scalar_select %p190, %s23, 0
          %s192 = sadd.s32 %s191, %s189
          %s193 = smul.addr %s192, 4
          %s194 = scalar_lea.vmem %s2, %s193
        $region28: #{tpu_custom_call.1} parent=15 // pred_fallthru
          _
      $region16: #{tpu_custom_call.1} parent=5 // pred_fallthru
        _
      %p195 = scmp.le.s32.totalorder 1, %s15
      %p196 = scmp.lt.s32.totalorder %s15, 3
      %p197 = pnand %p195, %p196
      %p198 = pneg %p197
      // Predicated region
      $region29: #{tpu_custom_call.1} parent=5 // pred_check
        _
      $region30: #{tpu_custom_call.1} parent=5 // pred_check_branch
        %200 = sbr.rel (%p197) target = $region32
      $region31: #{tpu_custom_call.1} parent=5 // pred_region
        %s201 = ssub.s32 %s15, 1
        %s202 = sand.u32 %s42, 1
        %s203 = scalar_lea.sflag [#allocation3], %s202
        %s204 = sand.u32 %s42, 1
        %s205 = smul.addr %s204, 8
        %s206 = scalar_lea.vmem [#allocation2], %s205
        // Predicated region
        $region33: #{tpu_custom_call.1} parent=31 // pred_check
          %p207 = pneg %p55
        $region34: #{tpu_custom_call.1} parent=31 // pred_check_branch
          %209 = sbr.rel (%p207) target = $region36
        $region35: #{tpu_custom_call.1} parent=31 // pred_region
          %211 = dma.done %s203, 128
        $region36: #{tpu_custom_call.1} parent=31 // pred_fallthru
          _
        %s212 = sand.u32 %s42, 1
        %s213 = scalar_lea.sflag [#allocation3], %s212
        %s214 = sand.u32 %s42, 1
        %s215 = smul.addr %s214, 8
        %s216 = scalar_lea.vmem [#allocation2], %s215
        %p217 = pneg %p55
        %p218 = pneg %p52
        %p219 = scmp.lt.s32.totalorder %s24, 1
        %s220 = scalar_select %p219, %s24, 1
        %s221 = smul.addr %s220, 2
        %s222 = scalar_lea.vmem %s1, %s221
        %p223 = pneg %p81
        %p224 = pneg %p78
        %p225 = scmp.lt.s32.totalorder %s24, 1
        %s226 = scalar_select %p225, %s24, 1
        %p227 = scmp.lt.s32.totalorder %s25, 0
        %s228 = scalar_select %p227, %s25, 0
        %s229 = sadd.s32 %s228, %s226
        %s230 = smul.addr %s229, 4
        %s231 = scalar_lea.vmem %s2, %s230
        %p232 = pneg %p109
        %p233 = pneg %p106
        %p234 = pneg %p137
        %p235 = pneg %p134
        %s236 = sand.u32 %s124, 1
        %s237 = scalar_lea.sflag [#allocation4], %s236
        %s238 = sand.u32 %s124, 1
        %s239 = smul.addr %s238, 8
        %s240 = scalar_lea.vmem [#allocation5], %s239
        %p241 = scmp.lt.s32.totalorder %s24, 1
        %s242 = scalar_select %p241, %s24, 1
        %s243 = smul.addr %s242, 2
        %s244 = scalar_lea.vmem %s1, %s243
        %p245 = scmp.lt.s32.totalorder %s24, 1
        %s246 = scalar_select %p245, %s24, 1
        %p247 = scmp.lt.s32.totalorder %s25, 0
        %s248 = scalar_select %p247, %s25, 0
        %s249 = sadd.s32 %s248, %s246
        %s250 = smul.addr %s249, 4
        %s251 = scalar_lea.vmem %s2, %s250
        %v252 = vld [vmem:[%s251] sm:$0xf]
        %v253 = vld [vmem:[%s206] sm:$0xff]
        %v254 = vld [vmem:[%s244] sm:$0x3]
        %256 = vset.pattern.permute.xlu0 2
        %257 = vperm.xlu0 %256, %v252
        %v258 = vpop.permute.xlu0 %257
        %v261 = vperm.slane %v254, 0
        %v262 = vperm.slane %v254, 1
        %v265 = vmul.f32 %v258, %v261
        %v266 = vmul.f32 %v258, %v262
        %v269 = vrot.slane %v266, 4
        %vm270 = vcmask 1043456
        %v271 = vsel %vm270, %v265, %v269
        %v273 = vadd.f32 %v253, %v271
        %v274 = vmul.f32 %v273, 0.2
        %v275 = vmax.f32 %v273, %v274
        %277 = vst [vmem:[#allocation1] ss:$2 sm:$0xff] %v275
        %v278 = vld.sshfl [vmem:[#allocation1] sm:$0xff pattern:$0x75316420]
        %v279 = vld.sshfl [vmem:[#allocation1 + $0x8] sm:$0xff pattern:$0x75316420]
        %v282 = vsel %vm270, %v278, 0.0
        %v283 = vsel %vm270, %v279, 0.0
        %v284 = vadd.f32 %v282, %v283
        %285 = vadd.xlane.f32.xlu0 %v284
        %v286 = vpop.xlane.xlu0 %285
        %v287 = vmul.f32 %v275, %v275
        %289 = vst [vmem:[#allocation1] ss:$2 sm:$0xff] %v287
        %v290 = vld.sshfl [vmem:[#allocation1] sm:$0xff pattern:$0x75316420]
        %v291 = vld.sshfl [vmem:[#allocation1 + $0x8] sm:$0xff pattern:$0x75316420]
        %v294 = vsel %vm270, %v290, 0.0
        %v295 = vsel %vm270, %v291, 0.0
        %v296 = vadd.f32 %v294, %v295
        %297 = vadd.xlane.f32.xlu0 %v296
        %v298 = vpop.xlane.xlu0 %297
        %v299 = vmul.f32 %v286, 0.00390625
        %v300 = vmul.f32 %v298, 0.00390625
        %v301 = vmul.f32 %v299, %v299
        %v302 = vsub.f32 %v300, %v301
        %v303 = vmax.f32 %v302, 0.0
        %v304 = vadd.f32 %v303, 1e-05
        %v305 = vrsqrt.pop %v304
        %v306 = vmul.f32 %v305, %v304
        %v307 = vmul.f32 %v306, %v305
        %v308 = vmul.f32 0.5, %v307
        %v309 = vsub.f32 1.5, %v308
        %v310 = vmul.f32 %v305, %v309
        %vm311 = vweird.f32 %v304
        %vm312 = vweird.f32 %v305
        %vm313 = vmor %vm311, %vm312
        %v314 = vsel %vm313, %v305, %v310
        %v315 = vmul.f32 %v314, %v252
        %v316 = vmul.f32 %v299, %v315
        %318 = vrot.lane.b32.xlu0 %v316, 1
        %v319 = vpop.permute.xlu0 %318
        %v321 = vsub.f32 %v252, %v319
        %323 = vset.pattern.permute.xlu0 0
        %324 = vperm.xlu0 %323, %v315
        %v325 = vpop.permute.xlu0 %324
        %v327 = vunpack.c.l.s4 839922192
        %v328 = vunpack.c.0.s8 %v327
        %v329 = vperm.slane %v325, %v328
        %v331 = vmul.f32 %v275, %v329
        %333 = vset.pattern.permute.xlu0 1
        %334 = vperm.xlu0 %333, %v321
        %v335 = vpop.permute.xlu0 %334
        %v337 = vunpack.c.l.s4 839922192
        %v338 = vunpack.c.0.s8 %v337
        %v339 = vperm.slane %v335, %v338
        %v341 = vadd.f32 %v331, %v339
        %342 = vst [vmem:[%s240] sm:$0xff] %v341
        %s343 = sand.u32 %s124, 1
        %s344 = scalar_lea.sflag [#allocation4], %s343
        %s345 = sand.u32 %s124, 1
        %s346 = smul.addr %s345, 8
        %s347 = scalar_lea.vmem [#allocation5], %s346
        // Predicated region
        $region37: #{tpu_custom_call.1} parent=31 // pred_check
          %p348 = pneg %p134
        $region38: #{tpu_custom_call.1} parent=31 // pred_check_branch
          %350 = sbr.rel (%p348) target = $region40
        $region39: #{tpu_custom_call.1} parent=31 // pred_region
          %352 = vsyncadd %s344, 0
          %s353 = smul.addr %s25, 2
          %s354 = smul.addr %s24, 2
          %s355 = sadd.s32 %s353, %s354
          %s356 = smul.addr %s355, 4
          %s357 = scalar_lea.hbm %s3, %s356
          %s359 = sshll.u32 %s347, 4
          %s360 = int_to_ptr.vmem [resolvable:$true] %s359
          %s361 = sshll.u32 %s357, 4
          %s362 = int_to_ptr.hbm [resolvable:$true] %s361
          %364 = dma.vmem_to_hbm [thread:$0]  %s360, 128, %s362, %s344
        $region40: #{tpu_custom_call.1} parent=31 // pred_fallthru
          _
      $region32: #{tpu_custom_call.1} parent=5 // pred_fallthru
        _
      %p365 = scmp.le.s32.totalorder 2, %s15
      // Predicated region
      $region41: #{tpu_custom_call.1} parent=5 // pred_check
        %p366 = pneg %p365
      $region42: #{tpu_custom_call.1} parent=5 // pred_check_branch
        %368 = sbr.rel (%p366) target = $region44
      $region43: #{tpu_custom_call.1} parent=5 // pred_region
        %s369 = ssub.s32 %s15, 2
        // Predicated region
        $region45: #{tpu_custom_call.1} parent=43 // pred_check
          %p370 = pneg %p140
        $region46: #{tpu_custom_call.1} parent=43 // pred_check_branch
          %372 = sbr.rel (%p370) target = $region48
        $region47: #{tpu_custom_call.1} parent=43 // pred_region
          %s373 = sand.u32 %s125, 1
          %s374 = scalar_lea.sflag [#allocation4], %s373
          %s375 = sand.u32 %s125, 1
          %s376 = smul.addr %s375, 8
          %s377 = scalar_lea.vmem [#allocation5], %s376
          %379 = dma.done %s374, 128
        $region48: #{tpu_custom_call.1} parent=43 // pred_fallthru
          _
      $region44: #{tpu_custom_call.1} parent=5 // pred_fallthru
        _
    $region6: #{tpu_custom_call.1} parent=1 // loop_footer
      %s19 = sadd.s32 1, %s15
    $region7: #{tpu_custom_call.1} parent=1 // loop_footer_branch
      %14 = sbr.rel target = $region3
    $region8: #{tpu_custom_call.1} parent=1 // loop_exit
      _
    %380 = vsyncpa [#allocation3], 1
    %s381 = scalar_lea.sflag [#allocation3], 1
    %382 = vsyncpa %s381, 1
    %383 = vsyncpa [#allocation4], 1
    %s384 = scalar_lea.sflag [#allocation4], 1
    %385 = vsyncpa %s384, 1

</llo_original>
